<compile_context>
chip_gen: v7x
topology: tpu7x:2x2x1
jax: 0.10.0
libtpu: 0.0.40
codegen_flags: <defaults>
</compile_context>

<pallas_src>
import jax
import jax.numpy as jnp
from jax.experimental import pallas as pl
from jax.experimental.pallas import tpu as pltpu


def _h_swish_kernel(x_ref, o_ref):
    x = x_ref[...]
    dt = x.dtype
    three = jnp.array(3.0, dtype=dt)
    zero = jnp.array(0.0, dtype=dt)
    six = jnp.array(6.0, dtype=dt)
    inv6 = jnp.array(1.0 / 6.0, dtype=dt)
    # h_sigmoid(x) = relu6(x + 3) / 6 ; h_swish(x) = x * h_sigmoid(x)
    hsig = jnp.clip(x + three, zero, six) * inv6
    o_ref[...] = (x * hsig).astype(o_ref.dtype)


def h_swish(x: jax.Array) -> jax.Array:
    """Elementwise h_swish, matching torch h_swish forward exactly."""
    orig_shape = x.shape
    orig_dtype = x.dtype
    n_elem = x.size
    itemsize = jnp.dtype(orig_dtype).itemsize

    LANE = 128
    SUB = 8

    # Fast path: pick the widest lane dimension W (multiple of 128) such that
    # the flat tensor reshapes zero-copy into (rows, W) with rows % 8 == 0.
    W = None
    for cand in (8192, 4096, 2048, 1024, 512, 256, 128):
        if n_elem % (SUB * cand) == 0:
            W = cand
            break

    if W is not None:
        rows = n_elem // W
        x2d = x.reshape(rows, W)  # pure layout change, no pad / no extra pass
        padded = False
    else:
        # Ragged fallback: pad the tail up to an (8, 128)-aligned slab.
        # h_swish(0) == 0, so zero padding is numerically safe.
        W = LANE
        rows = -(-n_elem // W)
        rows = -(-rows // SUB) * SUB
        pad = rows * W - n_elem
        x2d = jnp.pad(jnp.ravel(x), (0, pad)).reshape(rows, W)
        padded = True

    # ~2 MiB per input block: big enough to sit at the HBM roofline, small
    # enough that (2 in + 2 out) double-buffers stay well under v7x's scoped
    # VMEM limit with no vmem_limit_bytes bump.
    target_bytes = 2 * 1024 * 1024
    tile_r = (target_bytes // (W * itemsize)) // SUB * SUB
    tile_r = max(SUB, min(rows, tile_r))
    grid = (pl.cdiv(rows, tile_r),)

    out2d = pl.pallas_call(
        _h_swish_kernel,
        out_shape=jax.ShapeDtypeStruct((rows, W), orig_dtype),
        grid_spec=pltpu.PrefetchScalarGridSpec(
            num_scalar_prefetch=0,
            grid=grid,
            in_specs=[pl.BlockSpec((tile_r, W), lambda i: (i, 0))],
            out_specs=pl.BlockSpec((tile_r, W), lambda i: (i, 0)),
        ),
        compiler_params=pltpu.CompilerParams(
            dimension_semantics=("parallel",)),
        cost_estimate=pl.CostEstimate(
            flops=4 * n_elem,
            transcendentals=0,
            bytes_accessed=2 * n_elem * itemsize),
    )(x2d)

    if padded:
        return out2d.reshape(-1)[:n_elem].reshape(orig_shape)
    return out2d.reshape(orig_shape)


if __name__ == "__main__":
    key = jax.random.PRNGKey(0)
    # NCHW, same convention as the PyTorch module input.
    x = jax.random.normal(key, (2, 4, 16, 16), dtype=jnp.float32) * 4.0

    y = h_swish(x)
    jax.block_until_ready(y)

    # Reference check (pure JAX) for the exact torch semantics.
    y_ref = x * (jnp.clip(x + 3.0, 0.0, 6.0) / 6.0)
    assert y.shape == x.shape and y.dtype == x.dtype
    assert jnp.allclose(y, y_ref, atol=1e-6), "mismatch vs reference"

    print("KERNEL_OK")
</pallas_src>

<mosaic_0001>
module attributes {stable_mosaic.version = 11 : i64} {
  func.func @_h_swish_kernel(%arg0: i32, %arg1: memref<8x256xf32, #tpu.memory_space<vmem>>, %arg2: memref<8x256xf32, #tpu.memory_space<vmem>>) attributes {dimension_semantics = [#tpu.dimension_semantics<parallel>], iteration_bounds = array<i64: 1>, scalar_prefetch = 0 : i64, scratch_operands = 0 : i64, tpu.core_type = #tpu.core_type<tc>, window_params = [{transform_indices = @transform_0, window_bounds = array<i64: 8, 256>}, {transform_indices = @transform_1, window_bounds = array<i64: 8, 256>}]} {
    %c0 = arith.constant 0 : index
    %c0_0 = arith.constant 0 : index
    %0 = vector.load %arg1[%c0, %c0_0] : memref<8x256xf32, #tpu.memory_space<vmem>>, vector<8x256xf32>
    %cst = arith.constant 3.000000e+00 : f32
    %1 = vector.broadcast %cst : f32 to vector<8x256xf32>
    %2 = arith.addf %0, %1 : vector<8x256xf32>
    %cst_1 = arith.constant 0.000000e+00 : f32
    %cst_2 = arith.constant 6.000000e+00 : f32
    %3 = vector.broadcast %cst_1 : f32 to vector<8x256xf32>
    %4 = arith.maximumf %3, %2 : vector<8x256xf32>
    %5 = vector.broadcast %cst_2 : f32 to vector<8x256xf32>
    %6 = arith.minimumf %5, %4 : vector<8x256xf32>
    %cst_3 = arith.constant 0.166666672 : f32
    %7 = vector.broadcast %cst_3 : f32 to vector<8x256xf32>
    %8 = arith.mulf %6, %7 : vector<8x256xf32>
    %9 = arith.mulf %0, %8 : vector<8x256xf32>
    %c0_4 = arith.constant 0 : index
    %c0_5 = arith.constant 0 : index
    %10 = vector.load %arg2[%c0_4, %c0_5] : memref<8x256xf32, #tpu.memory_space<vmem>>, vector<8x256xf32>
    tpu.vector_store %arg2[%c0_4, %c0_5], %9 {strides = array<i32>} : memref<8x256xf32, #tpu.memory_space<vmem>>, vector<8x256xf32>,
    return
  }
  func.func @transform_0(%arg0: i32) -> (i32, i32) {
    %c0_i32 = arith.constant 0 : i32
    %c0_i32_0 = arith.constant 0 : i32
    return %arg0, %c0_i32 : i32, i32
  }
  func.func @transform_1(%arg0: i32) -> (i32, i32) {
    %c0_i32 = arith.constant 0 : i32
    %c0_i32_0 = arith.constant 0 : i32
    return %arg0, %c0_i32 : i32, i32
  }
}

</mosaic_0001>

<llo_original>
// kernel: tpu_custom_call.1
$region0: #{tpu_custom_call.1}
  #allocation0 [shape = 'u32[]', space=smem, size = 0x4, offset = 0x4, fixed_abs, tag = 'smem constant byte address 0x4 - core index']
  #allocation1 [shape = 'u32[144,128]{1,0:T(1,128)}', space=vmem, size = 0x12000, scoped, tag = 'internal scratch']
  %s0 = inlined_call_operand.hbm [shape: f32[8,256], index: 0, kind: input, shape index: {}]
  %s1 = inlined_call_operand.hbm [shape: f32[8,256], index: 1, kind: output, shape index: {}]
  %s2 = sld [smem:[#allocation0]]
  $region18: #{tpu_custom_call.1} parent=0
    _
  %s4 = ssub.s32 1, %s2
  %s5 = scalar_select 0, %s4, %s2
  $region1: #{tpu_custom_call.1} parent=0
    #allocation2 [shape = 'u8[8192]{0}', space=vmem, size = 0x2000, scoped, tag = 'input window, operand 0, single buffered']
    #allocation3 [shape = 's32[1]{0}', space=sflag, size = 0x4, scoped, tag = 'scoped memory for tpu_custom_call.1']
    #allocation4 [shape = 's32[1]{0}', space=sflag, size = 0x4, scoped, tag = 'scoped memory for tpu_custom_call.1']
    #allocation5 [shape = 'u8[8192]{0}', space=vmem, size = 0x2000, scoped, tag = 'output window, operand 0, single buffered']
    %6 = vsyncpa [#allocation3], 0
    %7 = vsyncpa [#allocation4], 0
    // Predicated region
    $region2: #{tpu_custom_call.1} parent=1 // pred_check
      _
    $region3: #{tpu_custom_call.1} parent=1 // pred_check_branch
      %9 = sbr.rel (0) target = $region5
    $region4: #{tpu_custom_call.1} parent=1 // pred_region
      %s11 = ssub.s32 256, 256
      %12 = vsyncadd [#allocation3], %s11
      %s14 = sshll.u32 [#allocation2], 4
      %s15 = int_to_ptr.vmem [resolvable:$true] %s14
      %17 = dma.hbm_to_vmem [thread:$0]  %s0, 256, %s15, [#allocation3]
    $region5: #{tpu_custom_call.1} parent=1 // pred_fallthru
      _
    // Predicated region
    $region6: #{tpu_custom_call.1} parent=1 // pred_check
      _
    $region7: #{tpu_custom_call.1} parent=1 // pred_check_branch
      %19 = sbr.rel (0) target = $region9
    $region8: #{tpu_custom_call.1} parent=1 // pred_region
      %20 = dma.done [#allocation3], 256
    $region9: #{tpu_custom_call.1} parent=1 // pred_fallthru
      _
    %v21 = vld [vmem:[#allocation2] sm:$0xff]
    %v22 = vld [vmem:[#allocation2 + $0x8] sm:$0xff]
    %v23 = vadd.f32 %v21, 3.0
    %v24 = vadd.f32 %v22, 3.0
    %v25 = vmax.f32 %v23, 0.0
    %v26 = vmax.f32 %v24, 0.0
    %v27 = vmin.f32 %v25, 6.0
    %v28 = vmin.f32 %v26, 6.0
    %v29 = vmul.f32 %v27, 0.16666667
    %v30 = vmul.f32 %v28, 0.16666667
    %v31 = vmul.f32 %v21, %v29
    %v32 = vmul.f32 %v22, %v30
    %33 = vst [vmem:[#allocation5] sm:$0xff] %v31
    %34 = vst [vmem:[#allocation5 + $0x8] sm:$0xff] %v32
    // Predicated region
    $region10: #{tpu_custom_call.1} parent=1 // pred_check
      _
    $region11: #{tpu_custom_call.1} parent=1 // pred_check_branch
      %36 = sbr.rel (0) target = $region13
    $region12: #{tpu_custom_call.1} parent=1 // pred_region
      %s38 = ssub.s32 256, 256
      %39 = vsyncadd [#allocation4], %s38
      %s41 = sshll.u32 [#allocation5], 4
      %s42 = int_to_ptr.vmem [resolvable:$true] %s41
      %44 = dma.vmem_to_hbm [thread:$0]  %s42, 256, %s1, [#allocation4]
    $region13: #{tpu_custom_call.1} parent=1 // pred_fallthru
      _
    // Predicated region
    $region14: #{tpu_custom_call.1} parent=1 // pred_check
      _
    $region15: #{tpu_custom_call.1} parent=1 // pred_check_branch
      %46 = sbr.rel (0) target = $region17
    $region16: #{tpu_custom_call.1} parent=1 // pred_region
      %47 = dma.done [#allocation4], 256
    $region17: #{tpu_custom_call.1} parent=1 // pred_fallthru
      _
    %48 = vsyncpa [#allocation3], 1
    %49 = vsyncpa [#allocation4], 1

</llo_original>
